<compile_context>
chip_gen: v5e
topology: v5e:2x2
jax: 0.10.0
libtpu: 0.0.40
codegen_flags: <defaults>
</compile_context>

<pallas_src>
import functools

import jax
import jax.numpy as jnp
from jax.experimental import pallas as pl
from jax.experimental.pallas import tpu as pltpu


def _round_up(x, m):
    return ((x + m - 1) // m) * m


def _pick_tile(dim_pad):
    """Largest tile in {512, 256, 128} dividing dim_pad (dim_pad is a 128-multiple)."""
    for c in (512, 256, 128):
        if dim_pad % c == 0:
            return c
    return 128


def _pick_row_tile(b8):
    """Largest sublane-aligned row tile (<=512) whose padding waste is <=25% of b8."""
    for c in (512, 256, 128, 64, 32, 16, 8):
        waste = (-b8) % c
        if 4 * waste <= b8:
            return c
    return 8


def _regrid_kernel(y_ref, sel_ref, bias_ref, o_ref, acc_ref):
    """out = y @ W + bias, tiled over (rows, eval-cols, data-cols[reduction])."""
    k = pl.program_id(2)

    @pl.when(k == 0)
    def _():
        acc_ref[...] = jnp.zeros_like(acc_ref)

    acc_ref[...] += jnp.dot(
        y_ref[...],
        sel_ref[...],
        preferred_element_type=jnp.float32,
        precision=jax.lax.Precision.HIGHEST,
    )

    @pl.when(k == pl.num_programs(2) - 1)
    def _():
        o_ref[...] = (acc_ref[...] + bias_ref[...]).astype(o_ref.dtype)


class Regrid:
    """Linear re-gridding along the last axis; hot path is a single fused
    selection-matmul + bias Pallas TPU kernel."""

    def __init__(self, x_eval, x_data, fill_value=0.0):
        x_eval = jnp.asarray(x_eval, jnp.float32)
        x_data = jnp.asarray(x_data, jnp.float32)
        n_data = x_data.shape[0]
        n_eval = x_eval.shape[0]

        inds = jnp.searchsorted(x_data, x_eval)          # side='left' == torch default
        inds = jnp.where(inds == 0, 1, inds)
        inds = jnp.where(inds == n_data, n_data - 1, inds)
        x0 = x_data[inds - 1]
        x1 = x_data[inds]
        # Duplicate knots (x1 == x0) -> NaN weights, same behavior as the torch module.
        w = (x_eval - x0) / (x1 - x0)
        mask = ((x_eval >= x_data[0]) & (x_eval <= x_data[-1])).astype(jnp.float32)

        # Raw buffers kept for reference/introspection (mirror torch register_buffer).
        self.inds = inds
        self.weights = w.astype(jnp.float32)
        self.mask = mask
        self.fill_value = jnp.float32(fill_value)

        # --- fused selection matrix + bias (built once; glue, not hot path) ---
        nd_pad = _round_up(n_data, 128)
        ne_pad = _round_up(n_eval, 128)
        k_idx = jnp.arange(n_data, dtype=jnp.int32)[:, None]
        sel = mask[None, :] * (
            (k_idx == (inds - 1)[None, :]).astype(jnp.float32) * (1.0 - w)[None, :]
            + (k_idx == inds[None, :]).astype(jnp.float32) * w[None, :]
        )
        bias = (1.0 - mask) * jnp.float32(fill_value)
        # Zero-pad to lane/sublane-friendly 128-multiples; padded rows/cols contribute 0.
        self.sel = (
            jnp.zeros((nd_pad, ne_pad), jnp.float32)
            .at[:n_data, :n_eval]
            .set(sel.astype(jnp.float32))
        )
        self.bias = jnp.zeros((1, ne_pad), jnp.float32).at[0, :n_eval].set(bias)

        self.n_data = n_data
        self.n_eval = n_eval
        self.nd_pad = nd_pad
        self.ne_pad = ne_pad
        self.tk = _pick_tile(nd_pad)   # reduction tile (data axis)
        self.tn = _pick_tile(ne_pad)   # output tile (eval axis), lane-dense

    @functools.partial(jax.jit, static_argnums=0)
    def __call__(self, y_data):
        y_data = jnp.asarray(y_data, jnp.float32)
        lead = y_data.shape[:-1]
        nd, ne = self.n_data, self.n_eval
        assert y_data.shape[-1] == nd

        y2d = y_data.reshape(-1, nd)
        b = y2d.shape[0]

        # Row tile: sublane-aligned, up to 512 rows per MXU pass, <=25% pad waste.
        b8 = _round_up(max(b, 1), 8)
        tb = _pick_row_tile(b8)
        b_pad = _round_up(b8, tb)

        nd_pad, ne_pad = self.nd_pad, self.ne_pad
        tk, tn = self.tk, self.tn

        # Skip the pad copy entirely when the input is already tile aligned.
        if (b_pad, nd_pad) != (b, nd):
            y_in = jnp.pad(y2d, ((0, b_pad - b), (0, nd_pad - nd)))
        else:
            y_in = y2d

        grid = (b_pad // tb, ne_pad // tn, nd_pad // tk)   # reduction axis last

        out_pad = pl.pallas_call(
            _regrid_kernel,
            out_shape=jax.ShapeDtypeStruct((b_pad, ne_pad), jnp.float32),
            grid_spec=pltpu.PrefetchScalarGridSpec(
                num_scalar_prefetch=0,
                grid=grid,
                in_specs=[
                    pl.BlockSpec((tb, tk), lambda i, j, k: (i, k)),   # y rows x K-slice
                    pl.BlockSpec((tk, tn), lambda i, j, k: (k, j)),   # fused selection W
                    pl.BlockSpec((1, tn), lambda i, j, k: (0, j)),    # bias row
                ],
                out_specs=pl.BlockSpec((tb, tn), lambda i, j, k: (i, j)),
                scratch_shapes=[pltpu.VMEM((tb, tn), jnp.float32)],
            ),
            compiler_params=pltpu.CompilerParams(
                dimension_semantics=("parallel", "parallel", "arbitrary"),
            ),
        )(y_in, self.sel, self.bias)

        out = out_pad
        if (b_pad, ne_pad) != (b, ne):
            out = out_pad[:b, :ne]
        return out.reshape(*lead, ne)


def _reference(regrid, y_data):
    """Plain-JAX reference mirroring the torch forward exactly."""
    y_data = jnp.asarray(y_data, jnp.float32)
    y0 = y_data[..., regrid.inds - 1]
    y1 = y_data[..., regrid.inds]
    y_eval = y0 + regrid.weights * (y1 - y0)
    return regrid.mask * y_eval + (1.0 - regrid.mask) * regrid.fill_value


def _run_case(key, batch, channels, n_data, n_eval, fill_value):
    k1, k2 = jax.random.split(key)
    x_data = jnp.linspace(0.0, 1.0, n_data, dtype=jnp.float32)
    # Some eval points fall outside [0, 1] to exercise the mask/fill path.
    x_eval = jnp.sort(jax.random.uniform(k1, (n_eval,), jnp.float32, -0.1, 1.1))
    y_data = jax.random.normal(k2, (batch, channels, n_data), jnp.float32)

    regrid = Regrid(x_eval, x_data, fill_value=fill_value)
    out = jax.block_until_ready(regrid(y_data))
    ref = _reference(regrid, y_data)

    assert out.shape == (batch, channels, n_eval)
    assert jnp.allclose(out, ref, atol=1e-5, rtol=1e-5), "mismatch vs reference"
    return out


if __name__ == "__main__":
    key = jax.random.PRNGKey(0)
    ka, kb, kc = jax.random.split(key, 3)

    # Case 1: tiny shapes matching the original demo (single grid step).
    _run_case(ka, batch=2, channels=4, n_data=32, n_eval=16, fill_value=-7.5)

    # Case 2: ragged sizes exercising padding in all dims and a multi-step
    # reduction axis (nd_pad=384 -> 3 K-tiles of 128; b=15 -> padded to 16 rows).
    _run_case(kb, batch=3, channels=5, n_data=300, n_eval=130, fill_value=2.25)

    # Case 3: fully aligned sizes (no pad / no slice copies on the hot path).
    _run_case(kc, batch=4, channels=32, n_data=128, n_eval=128, fill_value=0.0)

    print("KERNEL_OK")
</pallas_src>

<mosaic_0001>
module attributes {stable_mosaic.version = 11 : i64} {
  func.func @_regrid_kernel(%arg0: i32, %arg1: i32, %arg2: i32, %arg3: memref<8x128xf32, #tpu.memory_space<vmem>>, %arg4: memref<128x128xf32, #tpu.memory_space<vmem>>, %arg5: memref<1x128xf32, #tpu.memory_space<vmem>>, %arg6: memref<8x128xf32, #tpu.memory_space<vmem>>, %arg7: memref<8x128xf32, #tpu.memory_space<vmem>>) attributes {dimension_semantics = [#tpu.dimension_semantics<parallel>, #tpu.dimension_semantics<parallel>, #tpu.dimension_semantics<arbitrary>], iteration_bounds = array<i64: 1, 1, 1>, scalar_prefetch = 0 : i64, scratch_operands = 1 : i64, tpu.core_type = #tpu.core_type<tc>, window_params = [{transform_indices = @transform_0, window_bounds = array<i64: 8, 128>}, {transform_indices = @transform_1, window_bounds = array<i64: 128, 128>}, {transform_indices = @transform_2, window_bounds = array<i64: 1, 128>}, {transform_indices = @transform_3, window_bounds = array<i64: 8, 128>}]} {
    %c0_i32 = arith.constant 0 : i32
    %0 = arith.cmpi eq, %arg2, %c0_i32 : i32
    %1 = arith.extui %0 : i1 to i32
    %c0_i32_0 = arith.constant 0 : i32
    %2 = arith.cmpi ne, %1, %c0_i32_0 : i32
    scf.if %2 {
      %cst_10 = arith.constant 0.000000e+00 : f32
      %12 = vector.broadcast %cst_10 : f32 to vector<8x128xf32>
      %c0_11 = arith.constant 0 : index
      %c0_12 = arith.constant 0 : index
      %13 = vector.load %arg7[%c0_11, %c0_12] : memref<8x128xf32, #tpu.memory_space<vmem>>, vector<8x128xf32>
      tpu.vector_store %arg7[%c0_11, %c0_12], %12 {strides = array<i32>} : memref<8x128xf32, #tpu.memory_space<vmem>>, vector<8x128xf32>,
    } else {
    }
    %c0 = arith.constant 0 : index
    %c0_1 = arith.constant 0 : index
    %3 = vector.load %arg7[%c0, %c0_1] : memref<8x128xf32, #tpu.memory_space<vmem>>, vector<8x128xf32>
    %c0_2 = arith.constant 0 : index
    %c0_3 = arith.constant 0 : index
    %4 = vector.load %arg3[%c0_2, %c0_3] : memref<8x128xf32, #tpu.memory_space<vmem>>, vector<8x128xf32>
    %c0_4 = arith.constant 0 : index
    %c0_5 = arith.constant 0 : index
    %5 = vector.load %arg4[%c0_4, %c0_5] : memref<128x128xf32, #tpu.memory_space<vmem>>, vector<128x128xf32>
    %cst = arith.constant dense<0.000000e+00> : vector<8x128xf32>
    %6 = tpu.matmul %4, %5, %cst {dimension_numbers = #tpu.dot_dimension_numbers<[1], [0], [0], [1], [0, 0, 1, 1], [], []>, precision = #tpu.contract_precision<fp32>} : vector<8x128xf32>, vector<128x128xf32>, vector<8x128xf32> -> vector<8x128xf32>
    %7 = arith.addf %3, %6 : vector<8x128xf32>
    %c0_6 = arith.constant 0 : index
    %c0_7 = arith.constant 0 : index
    %8 = vector.load %arg7[%c0_6, %c0_7] : memref<8x128xf32, #tpu.memory_space<vmem>>, vector<8x128xf32>
    tpu.vector_store %arg7[%c0_6, %c0_7], %7 {strides = array<i32>} : memref<8x128xf32, #tpu.memory_space<vmem>>, vector<8x128xf32>,
    %c0_i32_8 = arith.constant 0 : i32
    %9 = arith.cmpi eq, %arg2, %c0_i32_8 : i32
    %10 = arith.extui %9 : i1 to i32
    %c0_i32_9 = arith.constant 0 : i32
    %11 = arith.cmpi ne, %10, %c0_i32_9 : i32
    scf.if %11 {
      %c0_10 = arith.constant 0 : index
      %c0_11 = arith.constant 0 : index
      %12 = vector.load %arg7[%c0_10, %c0_11] : memref<8x128xf32, #tpu.memory_space<vmem>>, vector<8x128xf32>
      %c0_12 = arith.constant 0 : index
      %c0_13 = arith.constant 0 : index
      %13 = vector.load %arg5[%c0_12, %c0_13] : memref<1x128xf32, #tpu.memory_space<vmem>>, vector<1x128xf32>
      %14 = vector.broadcast %13 : vector<1x128xf32> to vector<8x128xf32>
      %15 = arith.addf %12, %14 : vector<8x128xf32>
      %c0_14 = arith.constant 0 : index
      %c0_15 = arith.constant 0 : index
      %16 = vector.load %arg6[%c0_14, %c0_15] : memref<8x128xf32, #tpu.memory_space<vmem>>, vector<8x128xf32>
      tpu.vector_store %arg6[%c0_14, %c0_15], %15 {strides = array<i32>} : memref<8x128xf32, #tpu.memory_space<vmem>>, vector<8x128xf32>,
    } else {
    }
    return
  }
  func.func @transform_0(%arg0: i32, %arg1: i32, %arg2: i32) -> (i32, i32) {
    %c0_i32 = arith.constant 0 : i32
    return %arg0, %arg2 : i32, i32
  }
  func.func @transform_1(%arg0: i32, %arg1: i32, %arg2: i32) -> (i32, i32) {
    %c0_i32 = arith.constant 0 : i32
    return %arg2, %arg1 : i32, i32
  }
  func.func @transform_2(%arg0: i32, %arg1: i32, %arg2: i32) -> (i32, i32) {
    %c0_i32 = arith.constant 0 : i32
    %c0_i32_0 = arith.constant 0 : i32
    return %c0_i32, %arg1 : i32, i32
  }
  func.func @transform_3(%arg0: i32, %arg1: i32, %arg2: i32) -> (i32, i32) {
    %c0_i32 = arith.constant 0 : i32
    return %arg0, %arg1 : i32, i32
  }
}

</mosaic_0001>

<llo_original>
// kernel: a_call__.1
$region0: #{a_call__.1}
  #allocation0 [shape = 'u32[]', space=smem, size = 0x4, offset = 0x4, fixed_abs, tag = 'smem constant byte address 0x4 - core index']
  #allocation1 [shape = 'u32[72,128]{1,0:T(1,128)}', space=vmem, size = 0x9000, scoped, tag = 'internal scratch']
  #allocation2 [shape = 'f32[8,128]{1,0:T(8,128)}', space=vmem, size = 0x1000, scoped, tag = 'scratch operand']
  %s0 = inlined_call_operand.vmem [shape: f32[8,128], index: 0, kind: input, shape index: {}]
  %s1 = inlined_call_operand.hbm [shape: f32[128,128], index: 1, kind: input, shape index: {}]
  %s2 = inlined_call_operand.vmem [shape: f32[1,128], index: 2, kind: input, shape index: {}]
  %s3 = inlined_call_operand.hbm [shape: f32[8,128], index: 3, kind: output, shape index: {}]
  %s4 = sld [smem:[#allocation0]]
  $region34: #{a_call__.1} parent=0
    _
  %s6 = ssub.s32 1, %s4
  %s7 = scalar_select 0, %s6, %s4
  $region1: #{a_call__.1} parent=0
    #allocation3 [shape = 'u8[65536]{0}', space=vmem, size = 0x10000, scoped, tag = 'input window, operand 1, single buffered']
    #allocation4 [shape = 's32[1]{0}', space=sflag, size = 0x4, scoped, tag = 'scoped memory for a_call__.1']
    #allocation5 [shape = 's32[1]{0}', space=sflag, size = 0x4, scoped, tag = 'scoped memory for a_call__.1']
    #allocation6 [shape = 'u8[4096]{0}', space=vmem, size = 0x1000, scoped, tag = 'output window, operand 0, single buffered']
    %8 = vsyncpa [#allocation4], 0
    %9 = vsyncpa [#allocation5], 0
    // Predicated region
    $region2: #{a_call__.1} parent=1 // pred_check
      _
    $region3: #{a_call__.1} parent=1 // pred_check_branch
      %11 = sbr.rel (0) target = $region5
    $region4: #{a_call__.1} parent=1 // pred_region
      _
    $region5: #{a_call__.1} parent=1 // pred_fallthru
      _
    // Predicated region
    $region6: #{a_call__.1} parent=1 // pred_check
      _
    $region7: #{a_call__.1} parent=1 // pred_check_branch
      %13 = sbr.rel (0) target = $region9
    $region8: #{a_call__.1} parent=1 // pred_region
      %15 = vsyncadd [#allocation4], 0
      %s16 = sshll.u32 %s1, 4
      %s17 = int_to_ptr.hbm [resolvable:$true] %s16
      %s18 = sshll.u32 [#allocation3], 4
      %s19 = int_to_ptr.vmem [resolvable:$true] %s18
      %24 = dma.hbm_to_vmem [thread:$0]  %s17, 2048, %s19, [#allocation4], 128, 128, 8
    $region9: #{a_call__.1} parent=1 // pred_fallthru
      _
    // Predicated region
    $region10: #{a_call__.1} parent=1 // pred_check
      _
    $region11: #{a_call__.1} parent=1 // pred_check_branch
      %26 = sbr.rel (0) target = $region13
    $region12: #{a_call__.1} parent=1 // pred_region
      _
    $region13: #{a_call__.1} parent=1 // pred_fallthru
      _
    // Predicated region
    $region14: #{a_call__.1} parent=1 // pred_check
      _
    $region15: #{a_call__.1} parent=1 // pred_check_branch
      %28 = sbr.rel (0) target = $region17
    $region16: #{a_call__.1} parent=1 // pred_region
      %30 = dma.done [#allocation4], 2048
    $region17: #{a_call__.1} parent=1 // pred_fallthru
      _
    %p31 = scmp.eq.s32.totalorder 0, 0
    // Predicated region
    $region18: #{a_call__.1} parent=1 // pred_check
      %p32 = pneg %p31
    $region19: #{a_call__.1} parent=1 // pred_check_branch
      %34 = sbr.rel (%p32) target = $region21
    $region20: #{a_call__.1} parent=1 // pred_region
      %35 = vst [vmem:[#allocation2] sm:$0xff] 0.0
    $region21: #{a_call__.1} parent=1 // pred_fallthru
      _
    %v36 = vld [vmem:[#allocation2] sm:$0xff]
    %v37 = vld [vmem:[%s0] sm:$0xff]
    %v38 = vld [vmem:[#allocation3] sm:$0xff]
    %v39 = vld [vmem:[#allocation3 + $0x8] sm:$0xff]
    %v40 = vld [vmem:[#allocation3 + $0x10] sm:$0xff]
    %v41 = vld [vmem:[#allocation3 + $0x18] sm:$0xff]
    %v42 = vld [vmem:[#allocation3 + $0x20] sm:$0xff]
    %v43 = vld [vmem:[#allocation3 + $0x28] sm:$0xff]
    %v44 = vld [vmem:[#allocation3 + $0x30] sm:$0xff]
    %v45 = vld [vmem:[#allocation3 + $0x38] sm:$0xff]
    %v46 = vld [vmem:[#allocation3 + $0x40] sm:$0xff]
    %v47 = vld [vmem:[#allocation3 + $0x48] sm:$0xff]
    %v48 = vld [vmem:[#allocation3 + $0x50] sm:$0xff]
    %v49 = vld [vmem:[#allocation3 + $0x58] sm:$0xff]
    %v50 = vld [vmem:[#allocation3 + $0x60] sm:$0xff]
    %v51 = vld [vmem:[#allocation3 + $0x68] sm:$0xff]
    %v52 = vld [vmem:[#allocation3 + $0x70] sm:$0xff]
    %v53 = vld [vmem:[#allocation3 + $0x78] sm:$0xff]
    %v54 = vand.u32 %v53, 4294901760
    %55 = vmatpush.msra.mxu0 %v54
    %v56 = vand.u32 %v52, 4294901760
    %57 = vmatpush.msra.mxu0 %v56
    %v58 = vand.u32 %v51, 4294901760
    %59 = vmatpush.msra.mxu0 %v58
    %v60 = vand.u32 %v50, 4294901760
    %61 = vmatpush.msra.mxu0 %v60
    %v62 = vand.u32 %v49, 4294901760
    %63 = vmatpush.msra.mxu0 %v62
    %v64 = vand.u32 %v48, 4294901760
    %65 = vmatpush.msra.mxu0 %v64
    %v66 = vand.u32 %v47, 4294901760
    %67 = vmatpush.msra.mxu0 %v66
    %v68 = vand.u32 %v46, 4294901760
    %69 = vmatpush.msra.mxu0 %v68
    %v70 = vand.u32 %v45, 4294901760
    %71 = vmatpush.msra.mxu0 %v70
    %v72 = vand.u32 %v44, 4294901760
    %73 = vmatpush.msra.mxu0 %v72
    %v74 = vand.u32 %v43, 4294901760
    %75 = vmatpush.msra.mxu0 %v74
    %v76 = vand.u32 %v42, 4294901760
    %77 = vmatpush.msra.mxu0 %v76
    %v78 = vand.u32 %v41, 4294901760
    %79 = vmatpush.msra.mxu0 %v78
    %v80 = vand.u32 %v40, 4294901760
    %81 = vmatpush.msra.mxu0 %v80
    %v82 = vand.u32 %v39, 4294901760
    %83 = vmatpush.msra.mxu0 %v82
    %v84 = vand.u32 %v38, 4294901760
    %85 = vmatpush.msra.mxu0 %v84
    %v86 = vand.u32 %v37, 4294901760
    %v87 = vsub.f32 %v37, %v86
    %v88 = vand.u32 %v87, 4294901760
    %v89 = vsub.f32 %v87, %v88
    %v90 = vand.u32 %v89, 4294901760
    %91 = vmatmul.f32.gmra.mxu0 %v90
    %v92 = vpop.f32.mrf.mxu0
    %v93 = vadd.f32 0.0, %v92
    %94 = vdwg.mxu0
    %v95 = vand.u32 %v53, 4294901760
    %v96 = vsub.f32 %v53, %v95
    %v97 = vand.u32 %v96, 4294901760
    %v98 = vsub.f32 %v96, %v97
    %v99 = vand.u32 %v98, 4294901760
    %100 = vmatpush.msra.mxu0 %v99
    %v101 = vand.u32 %v52, 4294901760
    %v102 = vsub.f32 %v52, %v101
    %v103 = vand.u32 %v102, 4294901760
    %v104 = vsub.f32 %v102, %v103
    %v105 = vand.u32 %v104, 4294901760
    %106 = vmatpush.msra.mxu0 %v105
    %v107 = vand.u32 %v51, 4294901760
    %v108 = vsub.f32 %v51, %v107
    %v109 = vand.u32 %v108, 4294901760
    %v110 = vsub.f32 %v108, %v109
    %v111 = vand.u32 %v110, 4294901760
    %112 = vmatpush.msra.mxu0 %v111
    %v113 = vand.u32 %v50, 4294901760
    %v114 = vsub.f32 %v50, %v113
    %v115 = vand.u32 %v114, 4294901760
    %v116 = vsub.f32 %v114, %v115
    %v117 = vand.u32 %v116, 4294901760
    %118 = vmatpush.msra.mxu0 %v117
    %v119 = vand.u32 %v49, 4294901760
    %v120 = vsub.f32 %v49, %v119
    %v121 = vand.u32 %v120, 4294901760
    %v122 = vsub.f32 %v120, %v121
    %v123 = vand.u32 %v122, 4294901760
    %124 = vmatpush.msra.mxu0 %v123
    %v125 = vand.u32 %v48, 4294901760
    %v126 = vsub.f32 %v48, %v125
    %v127 = vand.u32 %v126, 4294901760
    %v128 = vsub.f32 %v126, %v127
    %v129 = vand.u32 %v128, 4294901760
    %130 = vmatpush.msra.mxu0 %v129
    %v131 = vand.u32 %v47, 4294901760
    %v132 = vsub.f32 %v47, %v131
    %v133 = vand.u32 %v132, 4294901760
    %v134 = vsub.f32 %v132, %v133
    %v135 = vand.u32 %v134, 4294901760
    %136 = vmatpush.msra.mxu0 %v135
    %v137 = vand.u32 %v46, 4294901760
    %v138 = vsub.f32 %v46, %v137
    %v139 = vand.u32 %v138, 4294901760
    %v140 = vsub.f32 %v138, %v139
    %v141 = vand.u32 %v140, 4294901760
    %142 = vmatpush.msra.mxu0 %v141
    %v143 = vand.u32 %v45, 4294901760
    %v144 = vsub.f32 %v45, %v143
    %v145 = vand.u32 %v144, 4294901760
    %v146 = vsub.f32 %v144, %v145
    %v147 = vand.u32 %v146, 4294901760
    %148 = vmatpush.msra.mxu0 %v147
    %v149 = vand.u32 %v44, 4294901760
    %v150 = vsub.f32 %v44, %v149
    %v151 = vand.u32 %v150, 4294901760
    %v152 = vsub.f32 %v150, %v151
    %v153 = vand.u32 %v152, 4294901760
    %154 = vmatpush.msra.mxu0 %v153
    %v155 = vand.u32 %v43, 4294901760
    %v156 = vsub.f32 %v43, %v155
    %v157 = vand.u32 %v156, 4294901760
    %v158 = vsub.f32 %v156, %v157
    %v159 = vand.u32 %v158, 4294901760
    %160 = vmatpush.msra.mxu0 %v159
    %v161 = vand.u32 %v42, 4294901760
    %v162 = vsub.f32 %v42, %v161
    %v163 = vand.u32 %v162, 4294901760
    %v164 = vsub.f32 %v162, %v163
    %v165 = vand.u32 %v164, 4294901760
    %166 = vmatpush.msra.mxu0 %v165
    %v167 = vand.u32 %v41, 4294901760
    %v168 = vsub.f32 %v41, %v167
    %v169 = vand.u32 %v168, 4294901760
    %v170 = vsub.f32 %v168, %v169
    %v171 = vand.u32 %v170, 4294901760
    %172 = vmatpush.msra.mxu0 %v171
    %v173 = vand.u32 %v40, 4294901760
    %v174 = vsub.f32 %v40, %v173
    %v175 = vand.u32 %v174, 4294901760
    %v176 = vsub.f32 %v174, %v175
    %v177 = vand.u32 %v176, 4294901760
    %178 = vmatpush.msra.mxu0 %v177
    %v179 = vand.u32 %v39, 4294901760
    %v180 = vsub.f32 %v39, %v179
    %v181 = vand.u32 %v180, 4294901760
    %v182 = vsub.f32 %v180, %v181
    %v183 = vand.u32 %v182, 4294901760
    %184 = vmatpush.msra.mxu0 %v183
    %v185 = vand.u32 %v38, 4294901760
    %v186 = vsub.f32 %v38, %v185
    %v187 = vand.u32 %v186, 4294901760
    %v188 = vsub.f32 %v186, %v187
    %v189 = vand.u32 %v188, 4294901760
    %190 = vmatpush.msra.mxu0 %v189
    %v191 = vand.u32 %v37, 4294901760
    %192 = vmatmul.f32.gmra.mxu0 %v191
    %v193 = vpop.f32.mrf.mxu0
    %v194 = vadd.f32 %v93, %v193
    %195 = vdwg.mxu0
    %v196 = vand.u32 %v53, 4294901760
    %v197 = vsub.f32 %v53, %v196
    %198 = vmatpush.msra.mxu0 %v197
    %v199 = vand.u32 %v52, 4294901760
    %v200 = vsub.f32 %v52, %v199
    %201 = vmatpush.msra.mxu0 %v200
    %v202 = vand.u32 %v51, 4294901760
    %v203 = vsub.f32 %v51, %v202
    %204 = vmatpush.msra.mxu0 %v203
    %v205 = vand.u32 %v50, 4294901760
    %v206 = vsub.f32 %v50, %v205
    %207 = vmatpush.msra.mxu0 %v206
    %v208 = vand.u32 %v49, 4294901760
    %v209 = vsub.f32 %v49, %v208
    %210 = vmatpush.msra.mxu0 %v209
    %v211 = vand.u32 %v48, 4294901760
    %v212 = vsub.f32 %v48, %v211
    %213 = vmatpush.msra.mxu0 %v212
    %v214 = vand.u32 %v47, 4294901760
    %v215 = vsub.f32 %v47, %v214
    %216 = vmatpush.msra.mxu0 %v215
    %v217 = vand.u32 %v46, 4294901760
    %v218 = vsub.f32 %v46, %v217
    %219 = vmatpush.msra.mxu0 %v218
    %v220 = vand.u32 %v45, 4294901760
    %v221 = vsub.f32 %v45, %v220
    %222 = vmatpush.msra.mxu0 %v221
    %v223 = vand.u32 %v44, 4294901760
    %v224 = vsub.f32 %v44, %v223
    %225 = vmatpush.msra.mxu0 %v224
    %v226 = vand.u32 %v43, 4294901760
    %v227 = vsub.f32 %v43, %v226
    %228 = vmatpush.msra.mxu0 %v227
    %v229 = vand.u32 %v42, 4294901760
    %v230 = vsub.f32 %v42, %v229
    %231 = vmatpush.msra.mxu0 %v230
    %v232 = vand.u32 %v41, 4294901760
    %v233 = vsub.f32 %v41, %v232
    %234 = vmatpush.msra.mxu0 %v233
    %v235 = vand.u32 %v40, 4294901760
    %v236 = vsub.f32 %v40, %v235
    %237 = vmatpush.msra.mxu0 %v236
    %v238 = vand.u32 %v39, 4294901760
    %v239 = vsub.f32 %v39, %v238
    %240 = vmatpush.msra.mxu0 %v239
    %v241 = vand.u32 %v38, 4294901760
    %v242 = vsub.f32 %v38, %v241
    %243 = vmatpush.msra.mxu0 %v242
    %v244 = vand.u32 %v37, 4294901760
    %v245 = vsub.f32 %v37, %v244
    %246 = vmatmul.f32.gmra.mxu0 %v245
    %v247 = vpop.f32.mrf.mxu0
    %v248 = vadd.f32 %v194, %v247
    %249 = vdwg.mxu0
    %v250 = vand.u32 %v53, 4294901760
    %251 = vmatpush.msra.mxu0 %v250
    %v252 = vand.u32 %v52, 4294901760
    %253 = vmatpush.msra.mxu0 %v252
    %v254 = vand.u32 %v51, 4294901760
    %255 = vmatpush.msra.mxu0 %v254
    %v256 = vand.u32 %v50, 4294901760
    %257 = vmatpush.msra.mxu0 %v256
    %v258 = vand.u32 %v49, 4294901760
    %259 = vmatpush.msra.mxu0 %v258
    %v260 = vand.u32 %v48, 4294901760
    %261 = vmatpush.msra.mxu0 %v260
    %v262 = vand.u32 %v47, 4294901760
    %263 = vmatpush.msra.mxu0 %v262
    %v264 = vand.u32 %v46, 4294901760
    %265 = vmatpush.msra.mxu0 %v264
    %v266 = vand.u32 %v45, 4294901760
    %267 = vmatpush.msra.mxu0 %v266
    %v268 = vand.u32 %v44, 4294901760
    %269 = vmatpush.msra.mxu0 %v268
    %v270 = vand.u32 %v43, 4294901760
    %271 = vmatpush.msra.mxu0 %v270
    %v272 = vand.u32 %v42, 4294901760
    %273 = vmatpush.msra.mxu0 %v272
    %v274 = vand.u32 %v41, 4294901760
    %275 = vmatpush.msra.mxu0 %v274
    %v276 = vand.u32 %v40, 4294901760
    %277 = vmatpush.msra.mxu0 %v276
    %v278 = vand.u32 %v39, 4294901760
    %279 = vmatpush.msra.mxu0 %v278
    %v280 = vand.u32 %v38, 4294901760
    %281 = vmatpush.msra.mxu0 %v280
    %v282 = vand.u32 %v37, 4294901760
    %v283 = vsub.f32 %v37, %v282
    %v284 = vand.u32 %v283, 4294901760
    %285 = vmatmul.f32.gmra.mxu0 %v284
    %v286 = vpop.f32.mrf.mxu0
    %v287 = vadd.f32 %v248, %v286
    %288 = vdwg.mxu0
    %v289 = vand.u32 %v53, 4294901760
    %v290 = vsub.f32 %v53, %v289
    %v291 = vand.u32 %v290, 4294901760
    %292 = vmatpush.msra.mxu0 %v291
    %v293 = vand.u32 %v52, 4294901760
    %v294 = vsub.f32 %v52, %v293
    %v295 = vand.u32 %v294, 4294901760
    %296 = vmatpush.msra.mxu0 %v295
    %v297 = vand.u32 %v51, 4294901760
    %v298 = vsub.f32 %v51, %v297
    %v299 = vand.u32 %v298, 4294901760
    %300 = vmatpush.msra.mxu0 %v299
    %v301 = vand.u32 %v50, 4294901760
    %v302 = vsub.f32 %v50, %v301
    %v303 = vand.u32 %v302, 4294901760
    %304 = vmatpush.msra.mxu0 %v303
    %v305 = vand.u32 %v49, 4294901760
    %v306 = vsub.f32 %v49, %v305
    %v307 = vand.u32 %v306, 4294901760
    %308 = vmatpush.msra.mxu0 %v307
    %v309 = vand.u32 %v48, 4294901760
    %v310 = vsub.f32 %v48, %v309
    %v311 = vand.u32 %v310, 4294901760
    %312 = vmatpush.msra.mxu0 %v311
    %v313 = vand.u32 %v47, 4294901760
    %v314 = vsub.f32 %v47, %v313
    %v315 = vand.u32 %v314, 4294901760
    %316 = vmatpush.msra.mxu0 %v315
    %v317 = vand.u32 %v46, 4294901760
    %v318 = vsub.f32 %v46, %v317
    %v319 = vand.u32 %v318, 4294901760
    %320 = vmatpush.msra.mxu0 %v319
    %v321 = vand.u32 %v45, 4294901760
    %v322 = vsub.f32 %v45, %v321
    %v323 = vand.u32 %v322, 4294901760
    %324 = vmatpush.msra.mxu0 %v323
    %v325 = vand.u32 %v44, 4294901760
    %v326 = vsub.f32 %v44, %v325
    %v327 = vand.u32 %v326, 4294901760
    %328 = vmatpush.msra.mxu0 %v327
    %v329 = vand.u32 %v43, 4294901760
    %v330 = vsub.f32 %v43, %v329
    %v331 = vand.u32 %v330, 4294901760
    %332 = vmatpush.msra.mxu0 %v331
    %v333 = vand.u32 %v42, 4294901760
    %v334 = vsub.f32 %v42, %v333
    %v335 = vand.u32 %v334, 4294901760
    %336 = vmatpush.msra.mxu0 %v335
    %v337 = vand.u32 %v41, 4294901760
    %v338 = vsub.f32 %v41, %v337
    %v339 = vand.u32 %v338, 4294901760
    %340 = vmatpush.msra.mxu0 %v339
    %v341 = vand.u32 %v40, 4294901760
    %v342 = vsub.f32 %v40, %v341
    %v343 = vand.u32 %v342, 4294901760
    %344 = vmatpush.msra.mxu0 %v343
    %v345 = vand.u32 %v39, 4294901760
    %v346 = vsub.f32 %v39, %v345
    %v347 = vand.u32 %v346, 4294901760
    %348 = vmatpush.msra.mxu0 %v347
    %v349 = vand.u32 %v38, 4294901760
    %v350 = vsub.f32 %v38, %v349
    %v351 = vand.u32 %v350, 4294901760
    %352 = vmatpush.msra.mxu0 %v351
    %v353 = vand.u32 %v37, 4294901760
    %354 = vmatmul.f32.gmra.mxu0 %v353
    %v355 = vpop.f32.mrf.mxu0
    %v356 = vadd.f32 %v287, %v355
    %357 = vdwg.mxu0
    %v358 = vand.u32 %v53, 4294901760
    %359 = vmatpush.msra.mxu0 %v358
    %v360 = vand.u32 %v52, 4294901760
    %361 = vmatpush.msra.mxu0 %v360
    %v362 = vand.u32 %v51, 4294901760
    %363 = vmatpush.msra.mxu0 %v362
    %v364 = vand.u32 %v50, 4294901760
    %365 = vmatpush.msra.mxu0 %v364
    %v366 = vand.u32 %v49, 4294901760
    %367 = vmatpush.msra.mxu0 %v366
    %v368 = vand.u32 %v48, 4294901760
    %369 = vmatpush.msra.mxu0 %v368
    %v370 = vand.u32 %v47, 4294901760
    %371 = vmatpush.msra.mxu0 %v370
    %v372 = vand.u32 %v46, 4294901760
    %373 = vmatpush.msra.mxu0 %v372
    %v374 = vand.u32 %v45, 4294901760
    %375 = vmatpush.msra.mxu0 %v374
    %v376 = vand.u32 %v44, 4294901760
    %377 = vmatpush.msra.mxu0 %v376
    %v378 = vand.u32 %v43, 4294901760
    %379 = vmatpush.msra.mxu0 %v378
    %v380 = vand.u32 %v42, 4294901760
    %381 = vmatpush.msra.mxu0 %v380
    %v382 = vand.u32 %v41, 4294901760
    %383 = vmatpush.msra.mxu0 %v382
    %v384 = vand.u32 %v40, 4294901760
    %385 = vmatpush.msra.mxu0 %v384
    %v386 = vand.u32 %v39, 4294901760
    %387 = vmatpush.msra.mxu0 %v386
    %v388 = vand.u32 %v38, 4294901760
    %389 = vmatpush.msra.mxu0 %v388
    %v390 = vand.u32 %v37, 4294901760
    %391 = vmatmul.f32.gmra.mxu0 %v390
    %v392 = vpop.f32.mrf.mxu0
    %v393 = vadd.f32 %v356, %v392
    %394 = vdwg.mxu0
    %v395 = vadd.f32 %v36, %v393
    %396 = vst [vmem:[#allocation2] sm:$0xff] %v395
    // Predicated region
    $region22: #{a_call__.1} parent=1 // pred_check
      %p397 = pneg %p31
    $region23: #{a_call__.1} parent=1 // pred_check_branch
      %399 = sbr.rel (%p397) target = $region25
    $region24: #{a_call__.1} parent=1 // pred_region
      %v400 = vld [vmem:[#allocation2] sm:$0xff]
      %v401 = vld [vmem:[%s2] sm:$0x1]
      %v403 = vperm.slane %v401, 0
      %v405 = vadd.f32 %v400, %v403
      %406 = vst [vmem:[#allocation6] sm:$0xff] %v405
    $region25: #{a_call__.1} parent=1 // pred_fallthru
      _
    // Predicated region
    $region26: #{a_call__.1} parent=1 // pred_check
      _
    $region27: #{a_call__.1} parent=1 // pred_check_branch
      %408 = sbr.rel (0) target = $region29
    $region28: #{a_call__.1} parent=1 // pred_region
      %410 = vsyncadd [#allocation5], 0
      %s412 = sshll.u32 [#allocation6], 4
      %s413 = int_to_ptr.vmem [resolvable:$true] %s412
      %s414 = sshll.u32 %s3, 4
      %s415 = int_to_ptr.hbm [resolvable:$true] %s414
      %417 = dma.vmem_to_hbm [thread:$0]  %s413, 128, %s415, [#allocation5]
    $region29: #{a_call__.1} parent=1 // pred_fallthru
      _
    // Predicated region
    $region30: #{a_call__.1} parent=1 // pred_check
      _
    $region31: #{a_call__.1} parent=1 // pred_check_branch
      %419 = sbr.rel (0) target = $region33
    $region32: #{a_call__.1} parent=1 // pred_region
      %421 = dma.done [#allocation5], 128
    $region33: #{a_call__.1} parent=1 // pred_fallthru
      _
    %422 = vsyncpa [#allocation4], 1
    %423 = vsyncpa [#allocation5], 1

</llo_original>
